<compile_context>
chip_gen: v7x
topology: tpu7x:2x2x1
jax: 0.10.0
libtpu: 0.0.40
codegen_flags: <defaults>
</compile_context>

<pallas_src>
import jax
import jax.numpy as jnp
from jax.experimental import pallas as pl
from jax.experimental.pallas import tpu as pltpu

_LANE = 128
_TARGET_BLOCK_BYTES = 4 * 1024 * 1024            # ~4 MiB of tensor data per buffer
_WIDTH_CANDIDATES = (8192, 4096, 2048, 1024, 512, 256, 128)
_FALLBACK_TILE_W = 32 * 1024                     # lane tile for the (1, n) fallback
_VMEM_LIMIT = 32 * 1024 * 1024


def _param_mish_kernel(beta_ref, x_ref, o_ref):
    # beta_ref: (1, 1) f32 scalar in SMEM; x_ref/o_ref: 2-D VMEM tiles.
    beta = beta_ref[0, 0]
    x = x_ref[...].astype(jnp.float32)
    z = beta * x
    # tanh(softplus(z)) = (e^{2z} + 2 e^z) / (e^{2z} + 2 e^z + 2), rewritten with
    # e = exp(-|z|) so only ONE EUP transcendental is needed and nothing overflows:
    #   s = (1 + e)^2,  b = (z >= 0 ? e^2 : 1)   ->   ratio = (s - b) / (s + b)
    #   z >= 0: (1 + 2e)   / (1 + 2e + 2e^2)
    #   z <  0: (2e + e^2) / (2 + 2e + e^2)
    e = jnp.exp(-jnp.abs(z))
    s = 1.0 + e
    s = s * s
    b = jnp.where(z >= 0.0, e * e, 1.0)
    num = s - b
    den = s + b                                  # den in (1, 5]: always safe to invert
    inv = pl.reciprocal(den, approx=True)        # cheap EUP vrcp
    inv = inv * (2.0 - den * inv)                # one Newton step (VALU) -> f32 accuracy
    o_ref[...] = (x * num * inv).astype(o_ref.dtype)


def _dimension_semantics():
    # v7x has 2 TensorCores per chip; only CORE_PARALLEL actually splits a grid
    # axis across them.  v5e/v6e have a single TC, where "parallel" is fine.
    try:
        kind = jax.devices()[0].device_kind.lower()
    except Exception:
        kind = ""
    if ("v7" in kind) or ("7x" in kind):
        return (pltpu.CORE_PARALLEL,)
    return ("parallel",)


def _launch(x2d, beta_arr, block, index_map, grid):
    return pl.pallas_call(
        _param_mish_kernel,
        out_shape=jax.ShapeDtypeStruct(x2d.shape, x2d.dtype),
        grid_spec=pltpu.PrefetchScalarGridSpec(
            num_scalar_prefetch=0,
            grid=grid,
            in_specs=[
                pl.BlockSpec(memory_space=pltpu.SMEM),   # beta (1, 1) scalar
                pl.BlockSpec(block, index_map),          # x tile
            ],
            out_specs=pl.BlockSpec(block, index_map),
        ),
        compiler_params=pltpu.CompilerParams(
            dimension_semantics=_dimension_semantics(),
            vmem_limit_bytes=_VMEM_LIMIT,
        ),
    )(beta_arr, x2d)


@jax.jit
def param_mish(x, beta):
    """Apply ParamMish elementwise to x (any shape). beta is a scalar."""
    orig_shape = x.shape
    n = x.size
    beta_arr = jnp.asarray(beta, dtype=jnp.float32).reshape(1, 1)
    flat = x.reshape(-1)
    # Byte budget -> element budget per block (so bf16 gets 2x the elements of f32).
    block_elems = max(_TARGET_BLOCK_BYTES // x.dtype.itemsize, 8 * _LANE)

    # Pick the widest lane-dense slab width; prefer one leaving >= 8 sublane rows.
    width = 0
    for w in _WIDTH_CANDIDATES:
        if n % w == 0 and n // w >= 8:
            width = w
            break
    if width == 0:
        for w in _WIDTH_CANDIDATES:
            if n % w == 0:
                width = w
                break

    if width:
        # Common (conv) case: no pad / slice passes around the opaque pallas_call.
        rows = n // width
        tile_r = min(rows, max(8, block_elems // width))
        grid = (pl.cdiv(rows, tile_r),)
        out2d = _launch(flat.reshape(rows, width), beta_arr,
                        (tile_r, width), lambda i: (i, 0), grid)
        return out2d.reshape(orig_shape)

    # Fallback: n is not a multiple of 128.  View the tensor as one lane-major
    # (1, n) row.  Small tensors use a single full-dim block (Mosaic pads the
    # lane dim internally); large tensors use 128-multiple lane tiles and rely
    # on Pallas edge-block masking for the final partial block.  Either way
    # there is no pad or slice pass over HBM.
    if n <= _FALLBACK_TILE_W:
        tile_w = n
    else:
        tile_w = _FALLBACK_TILE_W
    grid = (pl.cdiv(n, tile_w),)
    out2d = _launch(flat.reshape(1, n), beta_arr,
                    (1, tile_w), lambda i: (0, i), grid)
    return out2d.reshape(orig_shape)


if __name__ == "__main__":
    key = jax.random.PRNGKey(0)
    init_beta = 1.0  # matches the module default: nn.Parameter(torch.tensor(1.0))

    # Small NCHW input consistent with a conv-activation module.
    x = jax.random.normal(key, (2, 4, 16, 16), dtype=jnp.float32)
    y = jax.block_until_ready(param_mish(x, init_beta))

    beta = jnp.float32(init_beta)
    ref = x * jnp.tanh(jax.nn.softplus(beta * x))
    assert y.shape == x.shape and y.dtype == x.dtype
    assert jnp.allclose(y, ref, atol=1e-5, rtol=1e-5)

    # Odd element count (not a multiple of 128) exercises the no-pad fallback path.
    x_odd = jax.random.normal(jax.random.PRNGKey(1), (3, 5, 7), dtype=jnp.float32)
    y_odd = jax.block_until_ready(param_mish(x_odd, init_beta))
    ref_odd = x_odd * jnp.tanh(jax.nn.softplus(beta * x_odd))
    assert y_odd.shape == x_odd.shape and y_odd.dtype == x_odd.dtype
    assert jnp.allclose(y_odd, ref_odd, atol=1e-5, rtol=1e-5)

    print("KERNEL_OK")
</pallas_src>

<mosaic_0001>
module attributes {stable_mosaic.version = 11 : i64} {
  func.func @_param_mish_kernel(%arg0: i32, %arg1: memref<1x1xf32, #tpu.memory_space<smem>>, %arg2: memref<8x256xf32, #tpu.memory_space<vmem>>, %arg3: memref<8x256xf32, #tpu.memory_space<vmem>>) attributes {dimension_semantics = [#tpu.dimension_semantics<parallel>], iteration_bounds = array<i64: 1>, scalar_prefetch = 0 : i64, scratch_operands = 0 : i64, tpu.core_type = #tpu.core_type<tc>, window_params = [{transform_indices = @transform_0, window_bounds = array<i64: 1, 1>}, {transform_indices = @transform_1, window_bounds = array<i64: 8, 256>}, {transform_indices = @transform_2, window_bounds = array<i64: 8, 256>}]} {
    %c0 = arith.constant 0 : index
    %c0_0 = arith.constant 0 : index
    %0 = memref.load %arg1[%c0, %c0_0] : memref<1x1xf32, #tpu.memory_space<smem>>
    %c0_1 = arith.constant 0 : index
    %c0_2 = arith.constant 0 : index
    %1 = vector.load %arg2[%c0_1, %c0_2] : memref<8x256xf32, #tpu.memory_space<vmem>>, vector<8x256xf32>
    %2 = vector.broadcast %0 : f32 to vector<8x256xf32>
    %3 = arith.mulf %2, %1 : vector<8x256xf32>
    %4 = math.absf %3 : vector<8x256xf32>
    %cst = arith.constant 0.000000e+00 : f32
    %5 = vector.broadcast %cst : f32 to vector<8x256xf32>
    %6 = arith.subf %5, %4 : vector<8x256xf32>
    %7 = math.exp %6 : vector<8x256xf32>
    %cst_3 = arith.constant 1.000000e+00 : f32
    %8 = vector.broadcast %cst_3 : f32 to vector<8x256xf32>
    %9 = arith.addf %8, %7 : vector<8x256xf32>
    %10 = arith.mulf %9, %9 : vector<8x256xf32>
    %cst_4 = arith.constant 0.000000e+00 : f32
    %11 = vector.broadcast %cst_4 : f32 to vector<8x256xf32>
    %12 = arith.cmpf oge, %3, %11 : vector<8x256xf32>
    %13 = arith.mulf %7, %7 : vector<8x256xf32>
    %cst_5 = arith.constant 1.000000e+00 : f32
    %14 = vector.broadcast %cst_5 : f32 to vector<8x256xf32>
    %15 = arith.select %12, %13, %14 : vector<8x256xi1>, vector<8x256xf32>
    %16 = arith.subf %10, %15 : vector<8x256xf32>
    %17 = arith.addf %10, %15 : vector<8x256xf32>
    %18 = tpu.reciprocal %17 {approx = true} : vector<8x256xf32> -> vector<8x256xf32>
    %19 = arith.mulf %17, %18 : vector<8x256xf32>
    %cst_6 = arith.constant 2.000000e+00 : f32
    %20 = vector.broadcast %cst_6 : f32 to vector<8x256xf32>
    %21 = arith.subf %20, %19 : vector<8x256xf32>
    %22 = arith.mulf %18, %21 : vector<8x256xf32>
    %23 = arith.mulf %1, %16 : vector<8x256xf32>
    %24 = arith.mulf %23, %22 : vector<8x256xf32>
    %c0_7 = arith.constant 0 : index
    %c0_8 = arith.constant 0 : index
    %25 = vector.load %arg3[%c0_7, %c0_8] : memref<8x256xf32, #tpu.memory_space<vmem>>, vector<8x256xf32>
    tpu.vector_store %arg3[%c0_7, %c0_8], %24 {strides = array<i32>} : memref<8x256xf32, #tpu.memory_space<vmem>>, vector<8x256xf32>,
    return
  }
  func.func @transform_0(%arg0: i32) -> (i32, i32) {
    %c0_i32 = arith.constant 0 : i32
    %c0_i32_0 = arith.constant 0 : i32
    %c0_i32_1 = arith.constant 0 : i32
    return %c0_i32, %c0_i32_0 : i32, i32
  }
  func.func @transform_1(%arg0: i32) -> (i32, i32) {
    %c0_i32 = arith.constant 0 : i32
    %c0_i32_0 = arith.constant 0 : i32
    return %arg0, %c0_i32 : i32, i32
  }
  func.func @transform_2(%arg0: i32) -> (i32, i32) {
    %c0_i32 = arith.constant 0 : i32
    %c0_i32_0 = arith.constant 0 : i32
    return %arg0, %c0_i32 : i32, i32
  }
}

</mosaic_0001>

<llo_original>
// kernel: param_mish.1
$region0: #{param_mish.1}
  #allocation0 [shape = 'u32[]', space=smem, size = 0x4, offset = 0x4, fixed_abs, tag = 'smem constant byte address 0x4 - core index']
  #allocation1 [shape = 'u32[144,128]{1,0:T(1,128)}', space=vmem, size = 0x12000, scoped, tag = 'internal scratch']
  #allocation2 [shape = 'f32[1,1]{1,0:T(1,128)S(6)}', space=smem, size = 0x200, scoped, tag = 'scoped memory for param_mish.1']
  %s0 = inlined_call_operand.<no memory space> [shape: f32[1,1], index: 0, kind: input, shape index: {}]
  %s1 = inlined_call_operand.vmem [shape: f32[8,256], index: 1, kind: input, shape index: {}]
  %s2 = inlined_call_operand.vmem [shape: f32[8,256], index: 2, kind: output, shape index: {}]
  %s3 = sld [smem:[#allocation0]]
  $region18: #{param_mish.1} parent=0
    _
  %s5 = ssub.s32 1, %s3
  %s6 = scalar_select 0, %s5, %s3
  %7 = sst [smem:[#allocation2]] %s0
  // Predicated region
  $region2: #{param_mish.1} parent=0 // pred_check
    _
  $region3: #{param_mish.1} parent=0 // pred_check_branch
    %9 = sbr.rel (0) target = $region5
  $region4: #{param_mish.1} parent=0 // pred_region
    _
  $region5: #{param_mish.1} parent=0 // pred_fallthru
    _
  // Predicated region
  $region6: #{param_mish.1} parent=0 // pred_check
    _
  $region7: #{param_mish.1} parent=0 // pred_check_branch
    %11 = sbr.rel (0) target = $region9
  $region8: #{param_mish.1} parent=0 // pred_region
    _
  $region9: #{param_mish.1} parent=0 // pred_fallthru
    _
  %s12 = sld [smem:[#allocation2]]
  %v13 = vld [vmem:[%s1] sm:$0xff]
  %v14 = vld [vmem:[%s1 + $0x8] sm:$0xff]
  %v15 = vstv %s12
  %v16 = vmul.f32 %v15, %v13
  %v17 = vmul.f32 %v15, %v14
  %v18 = vand.u32 2147483647, %v16
  %v19 = vand.u32 2147483647, %v17
  %v20 = vsub.f32 0.0, %v18
  %v21 = vsub.f32 0.0, %v19
  %v22 = vmul.f32 %v20, 1.442695
  %v23 = vpow.pop %v22
  %v24 = vmul.f32 %v21, 1.442695
  %v25 = vpow.pop %v24
  %v26 = vadd.f32 %v23, 1.0
  %v27 = vadd.f32 %v25, 1.0
  %v28 = vmul.f32 %v26, %v26
  %v29 = vmul.f32 %v27, %v27
  %vm30 = vcmp.ge.f32.partialorder %v16, 0.0
  %vm31 = vcmp.ge.f32.partialorder %v17, 0.0
  %v32 = vmul.f32 %v23, %v23
  %v33 = vmul.f32 %v25, %v25
  %v34 = vsel %vm30, %v32, 1.0
  %v35 = vsel %vm31, %v33, 1.0
  %v36 = vsub.f32 %v28, %v34
  %v37 = vsub.f32 %v29, %v35
  %v38 = vadd.f32 %v28, %v34
  %v39 = vadd.f32 %v29, %v35
  %v40 = vrcp.pop %v38
  %v41 = vrcp.pop %v39
  %v42 = vmul.f32 %v38, %v40
  %v43 = vmul.f32 %v39, %v41
  %v44 = vsub.f32 2.0, %v42
  %v45 = vsub.f32 2.0, %v43
  %v46 = vmul.f32 %v40, %v44
  %v47 = vmul.f32 %v41, %v45
  %v48 = vmul.f32 %v13, %v36
  %v49 = vmul.f32 %v14, %v37
  %v50 = vmul.f32 %v48, %v46
  %v51 = vmul.f32 %v49, %v47
  %52 = vst [vmem:[%s2] sm:$0xff] %v50
  %53 = vst [vmem:[%s2 + $0x8] sm:$0xff] %v51
  // Predicated region
  $region10: #{param_mish.1} parent=0 // pred_check
    _
  $region11: #{param_mish.1} parent=0 // pred_check_branch
    %55 = sbr.rel (0) target = $region13
  $region12: #{param_mish.1} parent=0 // pred_region
    _
  $region13: #{param_mish.1} parent=0 // pred_fallthru
    _
  // Predicated region
  $region14: #{param_mish.1} parent=0 // pred_check
    _
  $region15: #{param_mish.1} parent=0 // pred_check_branch
    %57 = sbr.rel (0) target = $region17
  $region16: #{param_mish.1} parent=0 // pred_region
    _
  $region17: #{param_mish.1} parent=0 // pred_fallthru
    _

</llo_original>
